<compile_context>
chip_gen: v6e
topology: v6e:2x2x1
jax: 0.10.0
libtpu: 0.0.40
codegen_flags: <defaults>
</compile_context>

<pallas_src>
import functools

import jax
import jax.numpy as jnp
from jax.experimental import pallas as pl
from jax.experimental.pallas import tpu as pltpu


def _mce_kernel(x_ref, t_ref, out_ref, *, hw, tile_hw, need_mask):
    # x_ref, t_ref: (b_tile, C, tile_hw) — classes on sublanes, spatial on lanes.
    x = x_ref[...].astype(jnp.float32)
    t = t_ref[...].astype(jnp.float32)

    if need_mask:
        # Ragged spatial tail: out-of-bounds block contents are unspecified, so
        # BOTH x and t must be masked (0 * NaN/Inf would poison the partial sums).
        h = pl.program_id(1)
        col = h * tile_hw + jax.lax.broadcasted_iota(jnp.int32, x.shape, x.ndim - 1)
        valid = col < hw
        x = jnp.where(valid, x, 0.0)
        t = jnp.where(valid, t, 0.0)

    # Numerically-stable log-softmax pieces over the class (sublane) axis.
    m = jnp.max(x, axis=1, keepdims=True)                             # (b, 1, T)
    lse = jnp.log(jnp.sum(jnp.exp(x - m), axis=1, keepdims=True))     # (b, 1, T)
    sum_t = jnp.sum(t, axis=1, keepdims=True)                         # (b, 1, T)
    sum_xt = jnp.sum(x * t, axis=1, keepdims=True)                    # (b, 1, T)

    # sum_c(-(x - m - lse) * t) = (m + lse) * sum_c(t) - sum_c(x * t)
    num = jnp.sum((m + lse) * sum_t - sum_xt)   # per-block partial numerator
    den = jnp.sum(sum_t)                        # per-block partial denominator

    # Lane-dense partial output block: row 0 = num (broadcast), row 1 = den.
    row = jax.lax.broadcasted_iota(jnp.int32, (2, 128), 0)
    out_ref[...] = jnp.where(row == 0, num, den)


def _vmem_capacity_bytes():
    try:
        return int(pltpu.get_tpu_info().vmem_capacity_bytes)
    except Exception:
        return 64 * 1024 * 1024   # conservative fallback (v7x per-TC physical VMEM)


def _largest_divisor_leq(n, cap):
    cap = max(1, min(n, cap))
    for d in range(cap, 0, -1):
        if n % d == 0:
            return d
    return 1


def multi_cross_entropy(inp, target):
    """inp, target: NCHW arrays of identical shape. Returns the scalar loss."""
    assert inp.shape == target.shape
    B, C, H, W = inp.shape
    HW = H * W

    # ---- Generation-aware tile sizing (v5e/v6e: 128 MiB VMEM, v7x: 64 MiB). ----
    cap = _vmem_capacity_bytes()
    vmem_limit = int(cap * 0.75)            # ~48 MiB on v7x, ~96 MiB on v5e/v6e
    tile_budget = int(vmem_limit * 0.75)    # headroom for internal scratch / outputs

    # Bytes per lane-column: double-buffered input blocks plus ~5 live f32 (C, T)
    # temporaries in the body; C pads to a multiple of 8 sublanes in VMEM.
    c_pad = ((C + 7) // 8) * 8
    in_itemsize = jnp.dtype(inp.dtype).itemsize + jnp.dtype(target.dtype).itemsize
    bytes_per_col = 2 * c_pad * in_itemsize + 5 * c_pad * 4
    cols_budget = max(128, tile_budget // bytes_per_col)

    if HW <= cols_budget:
        # Whole spatial extent in one tile: block last dim == full array dim,
        # so no padding and no mask.  Spend the remaining budget on the batch
        # axis to amortize the fixed per-grid-step overhead.
        tile_hw = HW
        need_mask = False
        b_tile = _largest_divisor_leq(B, cols_budget // max(HW, 1))
    else:
        tile_hw = max(128, (cols_budget // 128) * 128)
        b_tile = 1
        need_mask = (HW % tile_hw) != 0
        if tile_hw >= HW:   # safety: never let a 128-aligned tile exceed HW
            tile_hw = HW
            need_mask = False

    n_b = B // b_tile
    n_hw = pl.cdiv(HW, tile_hw)

    # Native layout, no transpose, no padding copy: NCHW -> (B, C, HW) is free.
    x3 = inp.reshape(B, C, HW)
    t3 = target.reshape(B, C, HW)

    kernel = functools.partial(_mce_kernel, hw=HW, tile_hw=tile_hw, need_mask=need_mask)

    partials = pl.pallas_call(
        kernel,
        out_shape=jax.ShapeDtypeStruct((n_b, n_hw, 2, 128), jnp.float32),
        grid_spec=pltpu.PrefetchScalarGridSpec(
            num_scalar_prefetch=0,
            grid=(n_b, n_hw),
            in_specs=[
                pl.BlockSpec((b_tile, C, tile_hw), lambda b, h: (b, 0, h)),
                pl.BlockSpec((b_tile, C, tile_hw), lambda b, h: (b, 0, h)),
            ],
            out_specs=pl.BlockSpec((None, None, 2, 128), lambda b, h: (b, h, 0, 0)),
        ),
        compiler_params=pltpu.CompilerParams(
            dimension_semantics=("parallel", "parallel"),
            vmem_limit_bytes=vmem_limit,
        ),
    )(x3, t3)

    # Tiny final reduce + division in plain JAX.
    num = jnp.sum(partials[:, :, 0, 0])
    den = jnp.sum(partials[:, :, 1, 0])
    return num / den


def _reference(inp, target):
    x = inp.astype(jnp.float32)
    t = target.astype(jnp.float32)
    logit = jax.nn.log_softmax(x, axis=1)
    return jnp.sum(-logit * t) / jnp.sum(t)


if __name__ == "__main__":
    key = jax.random.PRNGKey(0)
    k1, k2, k3, k4 = jax.random.split(key, 4)

    # Case 1: nominal small shape (single-tile, batch-blocked path).
    B, C, H, W = 2, 4, 16, 16
    x = jax.random.normal(k1, (B, C, H, W), dtype=jnp.float32)
    target = jax.nn.softmax(
        jax.random.normal(k2, (B, C, H, W), dtype=jnp.float32), axis=1)
    loss = jax.block_until_ready(multi_cross_entropy(x, target))
    ref = jax.block_until_ready(_reference(x, target))
    assert jnp.allclose(loss, ref, atol=1e-5, rtol=1e-5), (loss, ref)

    # Case 2: non-128-multiple spatial size (block last dim == full dim, no pad).
    B2, C2, H2, W2 = 2, 4, 13, 11
    x2 = jax.random.normal(k3, (B2, C2, H2, W2), dtype=jnp.float32)
    t2 = jax.nn.softmax(
        jax.random.normal(k4, (B2, C2, H2, W2), dtype=jnp.float32), axis=1)
    loss2 = jax.block_until_ready(multi_cross_entropy(x2, t2))
    ref2 = jax.block_until_ready(_reference(x2, t2))
    assert jnp.allclose(loss2, ref2, atol=1e-5, rtol=1e-5), (loss2, ref2)

    print("KERNEL_OK")
</pallas_src>

<mosaic_0001>
module attributes {stable_mosaic.version = 11 : i64} {
  func.func @_mce_kernel(%arg0: i32, %arg1: i32, %arg2: memref<2x4x256xf32, #tpu.memory_space<vmem>>, %arg3: memref<2x4x256xf32, #tpu.memory_space<vmem>>, %arg4: memref<1x1x2x128xf32, #tpu.memory_space<vmem>>) attributes {dimension_semantics = [#tpu.dimension_semantics<parallel>, #tpu.dimension_semantics<parallel>], iteration_bounds = array<i64: 1, 1>, scalar_prefetch = 0 : i64, scratch_operands = 0 : i64, tpu.core_type = #tpu.core_type<tc>, window_params = [{transform_indices = @transform_0, window_bounds = array<i64: 2, 4, 256>}, {transform_indices = @transform_1, window_bounds = array<i64: 2, 4, 256>}, {transform_indices = @transform_2, window_bounds = array<i64: 1, 1, 2, 128>}]} {
    %c0 = arith.constant 0 : index
    %c0_0 = arith.constant 0 : index
    %c0_1 = arith.constant 0 : index
    %0 = vector.load %arg2[%c0, %c0_0, %c0_1] : memref<2x4x256xf32, #tpu.memory_space<vmem>>, vector<2x4x256xf32>
    %c0_2 = arith.constant 0 : index
    %c0_3 = arith.constant 0 : index
    %c0_4 = arith.constant 0 : index
    %1 = vector.load %arg3[%c0_2, %c0_3, %c0_4] : memref<2x4x256xf32, #tpu.memory_space<vmem>>, vector<2x4x256xf32>
    %cst = arith.constant dense<0xFF800000> : vector<2x256xf32>
    %2 = vector.multi_reduction <maximumf>, %0, %cst [1] : vector<2x4x256xf32> to vector<2x256xf32>
    %3 = vector.shape_cast %2 : vector<2x256xf32> to vector<2x1x256xf32>
    %4 = vector.broadcast %3 : vector<2x1x256xf32> to vector<2x4x256xf32>
    %5 = arith.subf %0, %4 : vector<2x4x256xf32>
    %6 = math.exp %5 : vector<2x4x256xf32>
    %cst_5 = arith.constant dense<0.000000e+00> : vector<2x256xf32>
    %7 = vector.multi_reduction <add>, %6, %cst_5 [1] : vector<2x4x256xf32> to vector<2x256xf32>
    %8 = vector.shape_cast %7 : vector<2x256xf32> to vector<2x1x256xf32>
    %9 = math.log %8 : vector<2x1x256xf32>
    %cst_6 = arith.constant dense<0.000000e+00> : vector<2x256xf32>
    %10 = vector.multi_reduction <add>, %1, %cst_6 [1] : vector<2x4x256xf32> to vector<2x256xf32>
    %11 = vector.shape_cast %10 : vector<2x256xf32> to vector<2x1x256xf32>
    %12 = arith.mulf %0, %1 : vector<2x4x256xf32>
    %cst_7 = arith.constant dense<0.000000e+00> : vector<2x256xf32>
    %13 = vector.multi_reduction <add>, %12, %cst_7 [1] : vector<2x4x256xf32> to vector<2x256xf32>
    %14 = vector.shape_cast %13 : vector<2x256xf32> to vector<2x1x256xf32>
    %15 = arith.addf %3, %9 : vector<2x1x256xf32>
    %16 = arith.mulf %15, %11 : vector<2x1x256xf32>
    %17 = arith.subf %16, %14 : vector<2x1x256xf32>
    %18 = vector.shape_cast %17 : vector<2x1x256xf32> to vector<1x2x1x256xf32>
    %cst_8 = arith.constant dense<0.000000e+00> : vector<1xf32>
    %19 = vector.multi_reduction <add>, %18, %cst_8 [1, 2, 3] : vector<1x2x1x256xf32> to vector<1xf32>
    %20 = vector.shape_cast %19 : vector<1xf32> to vector<1x1x1x1xf32>
    %21 = vector.extract %20[0, 0, 0, 0] : f32 from vector<1x1x1x1xf32>
    %22 = vector.shape_cast %11 : vector<2x1x256xf32> to vector<1x2x1x256xf32>
    %cst_9 = arith.constant dense<0.000000e+00> : vector<1xf32>
    %23 = vector.multi_reduction <add>, %22, %cst_9 [1, 2, 3] : vector<1x2x1x256xf32> to vector<1xf32>
    %24 = vector.shape_cast %23 : vector<1xf32> to vector<1x1x1x1xf32>
    %25 = vector.extract %24[0, 0, 0, 0] : f32 from vector<1x1x1x1xf32>
    %26 = tpu.iota {dimensions = array<i32: 0>} : vector<2x128xi32>
    %c0_i32 = arith.constant 0 : i32
    %27 = vector.broadcast %c0_i32 : i32 to vector<2x128xi32>
    %28 = arith.cmpi eq, %26, %27 : vector<2x128xi32>
    %29 = vector.broadcast %21 : f32 to vector<2x128xf32>
    %30 = vector.broadcast %25 : f32 to vector<2x128xf32>
    %31 = arith.select %28, %29, %30 : vector<2x128xi1>, vector<2x128xf32>
    %c0_10 = arith.constant 0 : index
    %c0_11 = arith.constant 0 : index
    %c0_12 = arith.constant 0 : index
    %c0_13 = arith.constant 0 : index
    %32 = vector.load %arg4[%c0_10, %c0_11, %c0_12, %c0_13] : memref<1x1x2x128xf32, #tpu.memory_space<vmem>>, vector<1x1x2x128xf32>
    %33 = vector.shape_cast %32 : vector<1x1x2x128xf32> to vector<2x128xf32>
    %34 = vector.shape_cast %31 : vector<2x128xf32> to vector<1x1x2x128xf32>
    tpu.vector_store %arg4[%c0_10, %c0_11, %c0_12, %c0_13], %34 {strides = array<i32>} : memref<1x1x2x128xf32, #tpu.memory_space<vmem>>, vector<1x1x2x128xf32>,
    return
  }
  func.func @transform_0(%arg0: i32, %arg1: i32) -> (i32, i32, i32) {
    %c0_i32 = arith.constant 0 : i32
    %c0_i32_0 = arith.constant 0 : i32
    return %arg0, %c0_i32, %arg1 : i32, i32, i32
  }
  func.func @transform_1(%arg0: i32, %arg1: i32) -> (i32, i32, i32) {
    %c0_i32 = arith.constant 0 : i32
    %c0_i32_0 = arith.constant 0 : i32
    return %arg0, %c0_i32, %arg1 : i32, i32, i32
  }
  func.func @transform_2(%arg0: i32, %arg1: i32) -> (i32, i32, i32, i32) {
    %c0_i32 = arith.constant 0 : i32
    %c0_i32_0 = arith.constant 0 : i32
    %c0_i32_1 = arith.constant 0 : i32
    return %arg0, %arg1, %c0_i32, %c0_i32_0 : i32, i32, i32, i32
  }
}

</mosaic_0001>

<llo_original>
// kernel: tpu_custom_call.1
$region0: #{tpu_custom_call.1}
  #allocation0 [shape = 'u32[]', space=smem, size = 0x4, offset = 0x4, fixed_abs, tag = 'smem constant byte address 0x4 - core index']
  #allocation1 [shape = 'u32[144,128]{1,0:T(1,128)}', space=vmem, size = 0x12000, scoped, tag = 'internal scratch']
  %s0 = inlined_call_operand.hbm [shape: f32[2,4,256], index: 0, kind: input, shape index: {}]
  %s1 = inlined_call_operand.hbm [shape: f32[2,4,256], index: 1, kind: input, shape index: {}]
  %s2 = inlined_call_operand.hbm [shape: f32[1,1,2,128], index: 2, kind: output, shape index: {}]
  %s3 = sld [smem:[#allocation0]]
  $region26: #{tpu_custom_call.1} parent=0
    _
  %s5 = ssub.s32 1, %s3
  %s6 = scalar_select 0, %s5, %s3
  $region1: #{tpu_custom_call.1} parent=0
    #allocation2 [shape = 'u8[8192]{0}', space=vmem, size = 0x2000, scoped, tag = 'input window, operand 0, single buffered']
    #allocation3 [shape = 's32[1]{0}', space=sflag, size = 0x4, scoped, tag = 'scoped memory for tpu_custom_call.1']
    #allocation4 [shape = 's32[1]{0}', space=sflag, size = 0x4, scoped, tag = 'scoped memory for tpu_custom_call.1']
    #allocation5 [shape = 'u8[8192]{0}', space=vmem, size = 0x2000, scoped, tag = 'input window, operand 1, single buffered']
    #allocation6 [shape = 's32[1]{0}', space=sflag, size = 0x4, scoped, tag = 'scoped memory for tpu_custom_call.1']
    #allocation7 [shape = 'u8[1024]{0}', space=vmem, size = 0x400, scoped, tag = 'output window, operand 0, single buffered']
    %7 = vsyncpa [#allocation3], 0
    %8 = vsyncpa [#allocation6], 0
    %9 = vsyncpa [#allocation4], 0
    // Predicated region
    $region2: #{tpu_custom_call.1} parent=1 // pred_check
      _
    $region3: #{tpu_custom_call.1} parent=1 // pred_check_branch
      %11 = sbr.rel (0) target = $region5
    $region4: #{tpu_custom_call.1} parent=1 // pred_region
      %s13 = ssub.s32 256, 256
      %14 = vsyncadd [#allocation3], %s13
      %s15 = sshll.u32 [#allocation2], 4
      %s16 = int_to_ptr.vmem [resolvable:$true] %s15
      %21 = dma.hbm_to_vmem [thread:$0]  %s0, 256, %s16, [#allocation3], 128, 128, 8
    $region5: #{tpu_custom_call.1} parent=1 // pred_fallthru
      _
    // Predicated region
    $region6: #{tpu_custom_call.1} parent=1 // pred_check
      _
    $region7: #{tpu_custom_call.1} parent=1 // pred_check_branch
      %23 = sbr.rel (0) target = $region9
    $region8: #{tpu_custom_call.1} parent=1 // pred_region
      %s25 = ssub.s32 256, 256
      %26 = vsyncadd [#allocation6], %s25
      %s27 = sshll.u32 [#allocation5], 4
      %s28 = int_to_ptr.vmem [resolvable:$true] %s27
      %33 = dma.hbm_to_vmem [thread:$0]  %s1, 256, %s28, [#allocation6], 128, 128, 8
    $region9: #{tpu_custom_call.1} parent=1 // pred_fallthru
      _
    // Predicated region
    $region10: #{tpu_custom_call.1} parent=1 // pred_check
      _
    $region11: #{tpu_custom_call.1} parent=1 // pred_check_branch
      %35 = sbr.rel (0) target = $region13
    $region12: #{tpu_custom_call.1} parent=1 // pred_region
      %36 = dma.done [#allocation3], 256
    $region13: #{tpu_custom_call.1} parent=1 // pred_fallthru
      _
    // Predicated region
    $region14: #{tpu_custom_call.1} parent=1 // pred_check
      _
    $region15: #{tpu_custom_call.1} parent=1 // pred_check_branch
      %38 = sbr.rel (0) target = $region17
    $region16: #{tpu_custom_call.1} parent=1 // pred_region
      %39 = dma.done [#allocation6], 256
    $region17: #{tpu_custom_call.1} parent=1 // pred_fallthru
      _
    %v40 = vld [vmem:[#allocation2] sm:$0xff]
    %v41 = vld [vmem:[#allocation2 + $0x8] sm:$0xff]
    %v42 = vld [vmem:[#allocation5] sm:$0xff]
    %v43 = vld [vmem:[#allocation5 + $0x8] sm:$0xff]
    %v46 = vcombine.high %v40, %v40
    %v47 = vcombine.high %v41, %v41
    %vm50 = vcmask 1043456
    %v51 = vsel %vm50, %v40, -inf
    %v52 = vrot.slane %v51, 4
    %v53 = vmax.f32 %v51, %v52
    %v54 = vrot.slane %v53, 2
    %v55 = vmax.f32 %v53, %v54
    %v56 = vrot.slane %v55, 1
    %v57 = vmax.f32 %v55, %v56
    %v58 = vsel %vm50, %v46, -inf
    %v59 = vrot.slane %v58, 4
    %v60 = vmax.f32 %v58, %v59
    %v61 = vrot.slane %v60, 2
    %v62 = vmax.f32 %v60, %v61
    %v63 = vrot.slane %v62, 1
    %v64 = vmax.f32 %v62, %v63
    %v65 = vsel %vm50, %v41, -inf
    %v66 = vrot.slane %v65, 4
    %v67 = vmax.f32 %v65, %v66
    %v68 = vrot.slane %v67, 2
    %v69 = vmax.f32 %v67, %v68
    %v70 = vrot.slane %v69, 1
    %v71 = vmax.f32 %v69, %v70
    %v72 = vsel %vm50, %v47, -inf
    %v73 = vrot.slane %v72, 4
    %v74 = vmax.f32 %v72, %v73
    %v75 = vrot.slane %v74, 2
    %v76 = vmax.f32 %v74, %v75
    %v77 = vrot.slane %v76, 1
    %v78 = vmax.f32 %v76, %v77
    %v83 = vcombine.low %v57, %v64
    %v84 = vcombine.low %v71, %v78
    %v87 = vsub.f32 %v40, %v83
    %v88 = vsub.f32 %v41, %v84
    %v89 = vmul.f32 %v87, 1.442695
    %v90 = vpow.pop %v89
    %v91 = vmul.f32 %v88, 1.442695
    %v92 = vpow.pop %v91
    %v95 = vcombine.high %v90, %v90
    %v96 = vcombine.high %v92, %v92
    %v99 = vsel %vm50, %v90, 0.0
    %v100 = vrot.slane %v99, 4
    %v101 = vadd.f32 %v99, %v100
    %v102 = vrot.slane %v101, 2
    %v103 = vadd.f32 %v101, %v102
    %v104 = vrot.slane %v103, 1
    %v105 = vadd.f32 %v103, %v104
    %v106 = vsel %vm50, %v95, 0.0
    %v107 = vrot.slane %v106, 4
    %v108 = vadd.f32 %v106, %v107
    %v109 = vrot.slane %v108, 2
    %v110 = vadd.f32 %v108, %v109
    %v111 = vrot.slane %v110, 1
    %v112 = vadd.f32 %v110, %v111
    %v113 = vsel %vm50, %v92, 0.0
    %v114 = vrot.slane %v113, 4
    %v115 = vadd.f32 %v113, %v114
    %v116 = vrot.slane %v115, 2
    %v117 = vadd.f32 %v115, %v116
    %v118 = vrot.slane %v117, 1
    %v119 = vadd.f32 %v117, %v118
    %v120 = vsel %vm50, %v96, 0.0
    %v121 = vrot.slane %v120, 4
    %v122 = vadd.f32 %v120, %v121
    %v123 = vrot.slane %v122, 2
    %v124 = vadd.f32 %v122, %v123
    %v125 = vrot.slane %v124, 1
    %v126 = vadd.f32 %v124, %v125
    %v127 = vlog2.pop %v105
    %v128 = vmul.f32 %v127, 0.6931472
    %v129 = vlog2.pop %v112
    %v130 = vmul.f32 %v129, 0.6931472
    %v131 = vlog2.pop %v119
    %v132 = vmul.f32 %v131, 0.6931472
    %v133 = vlog2.pop %v126
    %v134 = vmul.f32 %v133, 0.6931472
    %v137 = vcombine.high %v42, %v42
    %v138 = vcombine.high %v43, %v43
    %v141 = vsel %vm50, %v42, 0.0
    %v142 = vrot.slane %v141, 4
    %v143 = vadd.f32 %v141, %v142
    %v144 = vrot.slane %v143, 2
    %v145 = vadd.f32 %v143, %v144
    %v146 = vrot.slane %v145, 1
    %v147 = vadd.f32 %v145, %v146
    %v148 = vsel %vm50, %v137, 0.0
    %v149 = vrot.slane %v148, 4
    %v150 = vadd.f32 %v148, %v149
    %v151 = vrot.slane %v150, 2
    %v152 = vadd.f32 %v150, %v151
    %v153 = vrot.slane %v152, 1
    %v154 = vadd.f32 %v152, %v153
    %v155 = vsel %vm50, %v43, 0.0
    %v156 = vrot.slane %v155, 4
    %v157 = vadd.f32 %v155, %v156
    %v158 = vrot.slane %v157, 2
    %v159 = vadd.f32 %v157, %v158
    %v160 = vrot.slane %v159, 1
    %v161 = vadd.f32 %v159, %v160
    %v162 = vsel %vm50, %v138, 0.0
    %v163 = vrot.slane %v162, 4
    %v164 = vadd.f32 %v162, %v163
    %v165 = vrot.slane %v164, 2
    %v166 = vadd.f32 %v164, %v165
    %v167 = vrot.slane %v166, 1
    %v168 = vadd.f32 %v166, %v167
    %v169 = vmul.f32 %v40, %v42
    %v170 = vmul.f32 %v41, %v43
    %v173 = vcombine.high %v169, %v169
    %v174 = vcombine.high %v170, %v170
    %v177 = vsel %vm50, %v169, 0.0
    %v178 = vrot.slane %v177, 4
    %v179 = vadd.f32 %v177, %v178
    %v180 = vrot.slane %v179, 2
    %v181 = vadd.f32 %v179, %v180
    %v182 = vrot.slane %v181, 1
    %v183 = vadd.f32 %v181, %v182
    %v184 = vsel %vm50, %v173, 0.0
    %v185 = vrot.slane %v184, 4
    %v186 = vadd.f32 %v184, %v185
    %v187 = vrot.slane %v186, 2
    %v188 = vadd.f32 %v186, %v187
    %v189 = vrot.slane %v188, 1
    %v190 = vadd.f32 %v188, %v189
    %v191 = vsel %vm50, %v170, 0.0
    %v192 = vrot.slane %v191, 4
    %v193 = vadd.f32 %v191, %v192
    %v194 = vrot.slane %v193, 2
    %v195 = vadd.f32 %v193, %v194
    %v196 = vrot.slane %v195, 1
    %v197 = vadd.f32 %v195, %v196
    %v198 = vsel %vm50, %v174, 0.0
    %v199 = vrot.slane %v198, 4
    %v200 = vadd.f32 %v198, %v199
    %v201 = vrot.slane %v200, 2
    %v202 = vadd.f32 %v200, %v201
    %v203 = vrot.slane %v202, 1
    %v204 = vadd.f32 %v202, %v203
    %v205 = vadd.f32 %v57, %v128
    %v206 = vadd.f32 %v64, %v130
    %v207 = vadd.f32 %v71, %v132
    %v208 = vadd.f32 %v78, %v134
    %v209 = vmul.f32 %v205, %v147
    %v210 = vmul.f32 %v206, %v154
    %v211 = vmul.f32 %v207, %v161
    %v212 = vmul.f32 %v208, %v168
    %v213 = vsub.f32 %v209, %v183
    %v214 = vsub.f32 %v210, %v190
    %v215 = vsub.f32 %v211, %v197
    %v216 = vsub.f32 %v212, %v204
    %vm217 = vcmask 1040384
    %v218 = vsel %vm217, %v213, 0.0
    %v219 = vsel %vm217, %v214, 0.0
    %v220 = vadd.f32 %v218, %v219
    %v221 = vsel %vm217, %v215, 0.0
    %v222 = vadd.f32 %v220, %v221
    %v223 = vsel %vm217, %v216, 0.0
    %v224 = vadd.f32 %v222, %v223
    %225 = vadd.xlane.f32.xlu0 %v224
    %v226 = vpop.xlane.xlu0 %225
    %v227 = vrot.slane %v226, 4
    %v228 = vadd.f32 %v226, %v227
    %v229 = vrot.slane %v228, 2
    %v230 = vadd.f32 %v228, %v229
    %v231 = vrot.slane %v230, 1
    %v232 = vadd.f32 %v230, %v231
    %s233 = vtos %v232
    %v234 = vsel %vm217, %v147, 0.0
    %v235 = vsel %vm217, %v154, 0.0
    %v236 = vadd.f32 %v234, %v235
    %v237 = vsel %vm217, %v161, 0.0
    %v238 = vadd.f32 %v236, %v237
    %v239 = vsel %vm217, %v168, 0.0
    %v240 = vadd.f32 %v238, %v239
    %241 = vadd.xlane.f32.xlu0 %v240
    %v242 = vpop.xlane.xlu0 %241
    %v243 = vrot.slane %v242, 4
    %v244 = vadd.f32 %v242, %v243
    %v245 = vrot.slane %v244, 2
    %v246 = vadd.f32 %v244, %v245
    %v247 = vrot.slane %v246, 1
    %v248 = vadd.f32 %v246, %v247
    %s249 = vtos %v248
    %v250 = vlaneseq
    %v251 = vshrl.u32 %v250, 7
    %vm252 = vcmp.eq.s32.totalorder %v251, 0
    %v253 = vstv %s233
    %v254 = vstv %s249
    %v255 = vsel %vm252, %v253, %v254
    %256 = vst [vmem:[#allocation7] sm:$0x3] %v255
    // Predicated region
    $region18: #{tpu_custom_call.1} parent=1 // pred_check
      _
    $region19: #{tpu_custom_call.1} parent=1 // pred_check_branch
      %258 = sbr.rel (0) target = $region21
    $region20: #{tpu_custom_call.1} parent=1 // pred_region
      %s260 = ssub.s32 32, 32
      %261 = vsyncadd [#allocation4], %s260
      %s263 = sshll.u32 [#allocation7], 4
      %s264 = int_to_ptr.vmem [resolvable:$true] %s263
      %266 = dma.vmem_to_hbm [thread:$0]  %s264, 32, %s2, [#allocation4]
    $region21: #{tpu_custom_call.1} parent=1 // pred_fallthru
      _
    // Predicated region
    $region22: #{tpu_custom_call.1} parent=1 // pred_check
      _
    $region23: #{tpu_custom_call.1} parent=1 // pred_check_branch
      %268 = sbr.rel (0) target = $region25
    $region24: #{tpu_custom_call.1} parent=1 // pred_region
      %269 = dma.done [#allocation4], 32
    $region25: #{tpu_custom_call.1} parent=1 // pred_fallthru
      _
    %270 = vsyncpa [#allocation3], 1
    %271 = vsyncpa [#allocation6], 1
    %272 = vsyncpa [#allocation4], 1

</llo_original>
